<compile_context>
chip_gen: v7x
topology: tpu7x:2x2x1
jax: 0.10.0
libtpu: 0.0.40
codegen_flags: <defaults>
</compile_context>

<pallas_src>
import jax
import jax.numpy as jnp
from jax.experimental import pallas as pl
from jax.experimental.pallas import tpu as pltpu


def lstm_tagger_forward(token_ids, w_ih_t, w_hh_t, b, w_out_t, b_out):
    vocab, four_h = w_ih_t.shape
    hidden = w_hh_t.shape[0]
    tagset = w_out_t.shape[1]
    seq = token_ids.shape[0]
    assert four_h == 4 * hidden and four_h % 128 == 0
    cols = four_h                       # shared lane width of the packed params
    tag_pad = cols                      # lane-dense tag axis (>= tagset)
    assert tagset <= tag_pad

    # --- sigmoid -> tanh rewrite: scale i/f/o columns by 0.5 (exact). -------
    col_scale = jnp.concatenate(
        [jnp.full((1, hidden), 0.5, jnp.float32),      # i
         jnp.full((1, hidden), 0.5, jnp.float32),      # f
         jnp.full((1, hidden), 1.0, jnp.float32),      # g (stays tanh(x))
         jnp.full((1, hidden), 0.5, jnp.float32)],     # o
        axis=1)
    # One-hot input => x @ W_ih^T + b == (row of W_ih^T) + b: fold bias in.
    w_ih_eff = (w_ih_t + b) * col_scale                # (vocab, 4H)
    w_hh_sc = w_hh_t * col_scale                       # (H, 4H)

    # Lane-dense output: zero weight columns + -1e30 bias keep padded columns
    # inert in f32 log_softmax (exp underflows to 0, never wins the max).
    w_out_p = jnp.pad(w_out_t, ((0, 0), (0, tag_pad - tagset)))
    b_out_p = jnp.pad(b_out, ((0, 0), (0, tag_pad - tagset)),
                      constant_values=-1e30)

    # --- pack all parameters into one VMEM array (single input DMA). --------
    def pad_rows(a):
        return jnp.pad(a, ((0, (-a.shape[0]) % 8), (0, 0)))

    segs = [pad_rows(w_ih_eff), pad_rows(w_hh_sc),
            pad_rows(w_out_p), pad_rows(b_out_p)]
    offs, o = [], 0
    for s in segs:
        offs.append(o)
        o += s.shape[0]
    wih_off, whh_off, wout_off, bout_off = offs        # wih_off == 0
    params = jnp.concatenate(segs, axis=0).astype(jnp.float32)   # (88, 128)

    # Correctness: clamp ids so the dynamic row gather can never read past
    # the W_ih segment of the packed parameter block.
    ids = jnp.clip(token_ids.astype(jnp.int32), 0, vocab - 1)

    def kernel(ids_ref, p_ref, out_ref):
        # Hot path 1: per-token row gather (bias already folded in). The
        # gathers are independent of the recurrence, so issue them up front.
        xrows = [p_ref[pl.ds(ids_ref[t], 1), :] for t in range(seq)]  # (1,4H)

        # Static, 8-row-aligned views of the packed params.
        w_hh = p_ref[whh_off:whh_off + hidden, :]          # (H, 4H)
        w_out = p_ref[wout_off:wout_off + hidden, :]       # (H, TAG_PAD)
        b_o = p_ref[bout_off:bout_off + 1, :]              # (1, TAG_PAD)

        # Hot path 2: serial LSTM recurrence, fully unrolled, one tanh/step.
        h = jnp.zeros((1, hidden), jnp.float32)            # init_hidden(): zeros
        c = jnp.zeros((1, hidden), jnp.float32)
        hs = []
        for t in range(seq):                               # static unroll
            gates = xrows[t] + jnp.dot(
                h, w_hh, preferred_element_type=jnp.float32)   # (1, 4H)
            th = jnp.tanh(gates)                           # single EUP op/step
            i_g = 0.5 * th[:, 0 * hidden:1 * hidden] + 0.5  # sigmoid via tanh
            f_g = 0.5 * th[:, 1 * hidden:2 * hidden] + 0.5
            g_g = th[:, 2 * hidden:3 * hidden]
            o_g = 0.5 * th[:, 3 * hidden:4 * hidden] + 0.5
            c = f_g * c + i_g * g_g
            h = o_g * jnp.tanh(c)
            hs.append(h)
        h_seq = jnp.concatenate(hs, axis=0)                # (seq, H), off chain

        # Hot path 3: hidden2tag Linear + log_softmax (lane-dense, one vst).
        tag_space = jnp.dot(
            h_seq, w_out, preferred_element_type=jnp.float32) + b_o
        m = jnp.max(tag_space, axis=1, keepdims=True)
        z = tag_space - m
        lse = jnp.log(jnp.sum(jnp.exp(z), axis=1, keepdims=True))
        out_ref[...] = z - lse

    out_padded = pl.pallas_call(
        kernel,
        out_shape=jax.ShapeDtypeStruct((seq, tag_pad), jnp.float32),
        in_specs=[pl.BlockSpec(memory_space=pltpu.MemorySpace.SMEM),
                  pl.BlockSpec(memory_space=pltpu.MemorySpace.VMEM)],
        out_specs=pl.BlockSpec(memory_space=pltpu.MemorySpace.VMEM),
    )(ids, params)
    return out_padded[:, :tagset]


def reference_forward(x, w_ih_t, w_hh_t, b, w_out_t, b_out):
    """Plain-JAX reference matching PyTorch nn.LSTM + Linear + log_softmax."""
    seq, _ = x.shape
    hidden = w_hh_t.shape[0]
    h = jnp.zeros((1, hidden), jnp.float32)
    c = jnp.zeros((1, hidden), jnp.float32)
    outs = []
    for t in range(seq):
        gates = x[t:t + 1] @ w_ih_t + h @ w_hh_t + b
        i_g = jax.nn.sigmoid(gates[:, 0 * hidden:1 * hidden])
        f_g = jax.nn.sigmoid(gates[:, 1 * hidden:2 * hidden])
        g_g = jnp.tanh(gates[:, 2 * hidden:3 * hidden])
        o_g = jax.nn.sigmoid(gates[:, 3 * hidden:4 * hidden])
        c = f_g * c + i_g * g_g
        h = o_g * jnp.tanh(c)
        outs.append(h)
    lstm_out = jnp.concatenate(outs, axis=0)
    tag_space = lstm_out @ w_out_t + b_out
    return jax.nn.log_softmax(tag_space, axis=1)


if __name__ == "__main__":
    SEQ, VOCAB, HIDDEN, TAGSET = 8, 16, 32, 10

    key = jax.random.PRNGKey(0)
    k_x, k_wih, k_whh, k_bih, k_bhh, k_wout, k_bout = jax.random.split(key, 7)

    # Input tokens; the PyTorch module sees the (seq, 1, vocab) one-hot of these.
    token_ids = jax.random.randint(k_x, (SEQ,), 0, VOCAB)
    x = jax.nn.one_hot(token_ids, VOCAB, dtype=jnp.float32)

    # Deterministic synthetic parameters (nn.LSTM / nn.Linear shapes,
    # transposed for right-multiplication). Gate order i, f, g, o.
    scale = 0.1
    w_ih_t = scale * jax.random.normal(k_wih, (VOCAB, 4 * HIDDEN), jnp.float32)
    w_hh_t = scale * jax.random.normal(k_whh, (HIDDEN, 4 * HIDDEN), jnp.float32)
    b_ih = scale * jax.random.normal(k_bih, (1, 4 * HIDDEN), jnp.float32)
    b_hh = scale * jax.random.normal(k_bhh, (1, 4 * HIDDEN), jnp.float32)
    b = b_ih + b_hh  # PyTorch LSTM adds both biases
    w_out_t = scale * jax.random.normal(k_wout, (HIDDEN, TAGSET), jnp.float32)
    b_out = scale * jax.random.normal(k_bout, (1, TAGSET), jnp.float32)

    out = jax.jit(lstm_tagger_forward)(token_ids, w_ih_t, w_hh_t, b,
                                       w_out_t, b_out)
    out = jax.block_until_ready(out)

    ref = reference_forward(x, w_ih_t, w_hh_t, b, w_out_t, b_out)
    assert out.shape == (SEQ, TAGSET)
    assert jnp.allclose(out, ref, atol=1e-5, rtol=1e-5), "mismatch vs reference"

    print("KERNEL_OK")
</pallas_src>

<mosaic_0001>
module attributes {stable_mosaic.version = 11 : i64} {
  func.func @kernel(%arg0: memref<8xi32, #tpu.memory_space<smem>>, %arg1: memref<88x128xf32, #tpu.memory_space<vmem>>, %arg2: memref<8x128xf32, #tpu.memory_space<vmem>>) attributes {dimension_semantics = [], scalar_prefetch = 0 : i64, scratch_operands = 0 : i64, tpu.core_type = #tpu.core_type<tc>} {
    %c0 = arith.constant 0 : index
    %0 = memref.load %arg0[%c0] : memref<8xi32, #tpu.memory_space<smem>>
    %1 = arith.index_cast %0 : i32 to index
    %c0_0 = arith.constant 0 : index
    %2 = vector.load %arg1[%1, %c0_0] : memref<88x128xf32, #tpu.memory_space<vmem>>, vector<1x128xf32>
    %c1 = arith.constant 1 : index
    %3 = memref.load %arg0[%c1] : memref<8xi32, #tpu.memory_space<smem>>
    %4 = arith.index_cast %3 : i32 to index
    %c0_1 = arith.constant 0 : index
    %5 = vector.load %arg1[%4, %c0_1] : memref<88x128xf32, #tpu.memory_space<vmem>>, vector<1x128xf32>
    %c2 = arith.constant 2 : index
    %6 = memref.load %arg0[%c2] : memref<8xi32, #tpu.memory_space<smem>>
    %7 = arith.index_cast %6 : i32 to index
    %c0_2 = arith.constant 0 : index
    %8 = vector.load %arg1[%7, %c0_2] : memref<88x128xf32, #tpu.memory_space<vmem>>, vector<1x128xf32>
    %c3 = arith.constant 3 : index
    %9 = memref.load %arg0[%c3] : memref<8xi32, #tpu.memory_space<smem>>
    %10 = arith.index_cast %9 : i32 to index
    %c0_3 = arith.constant 0 : index
    %11 = vector.load %arg1[%10, %c0_3] : memref<88x128xf32, #tpu.memory_space<vmem>>, vector<1x128xf32>
    %c4 = arith.constant 4 : index
    %12 = memref.load %arg0[%c4] : memref<8xi32, #tpu.memory_space<smem>>
    %13 = arith.index_cast %12 : i32 to index
    %c0_4 = arith.constant 0 : index
    %14 = vector.load %arg1[%13, %c0_4] : memref<88x128xf32, #tpu.memory_space<vmem>>, vector<1x128xf32>
    %c5 = arith.constant 5 : index
    %15 = memref.load %arg0[%c5] : memref<8xi32, #tpu.memory_space<smem>>
    %16 = arith.index_cast %15 : i32 to index
    %c0_5 = arith.constant 0 : index
    %17 = vector.load %arg1[%16, %c0_5] : memref<88x128xf32, #tpu.memory_space<vmem>>, vector<1x128xf32>
    %c6 = arith.constant 6 : index
    %18 = memref.load %arg0[%c6] : memref<8xi32, #tpu.memory_space<smem>>
    %19 = arith.index_cast %18 : i32 to index
    %c0_6 = arith.constant 0 : index
    %20 = vector.load %arg1[%19, %c0_6] : memref<88x128xf32, #tpu.memory_space<vmem>>, vector<1x128xf32>
    %c7 = arith.constant 7 : index
    %21 = memref.load %arg0[%c7] : memref<8xi32, #tpu.memory_space<smem>>
    %22 = arith.index_cast %21 : i32 to index
    %c0_7 = arith.constant 0 : index
    %23 = vector.load %arg1[%22, %c0_7] : memref<88x128xf32, #tpu.memory_space<vmem>>, vector<1x128xf32>
    %c16 = arith.constant 16 : index
    %c0_8 = arith.constant 0 : index
    %24 = vector.load %arg1[%c16, %c0_8] : memref<88x128xf32, #tpu.memory_space<vmem>>, vector<32x128xf32>
    %c48 = arith.constant 48 : index
    %c0_9 = arith.constant 0 : index
    %25 = vector.load %arg1[%c48, %c0_9] : memref<88x128xf32, #tpu.memory_space<vmem>>, vector<32x128xf32>
    %c80 = arith.constant 80 : index
    %c0_10 = arith.constant 0 : index
    %26 = vector.load %arg1[%c80, %c0_10] : memref<88x128xf32, #tpu.memory_space<vmem>>, vector<1x128xf32>
    %cst = arith.constant 0.000000e+00 : f32
    %27 = vector.broadcast %cst : f32 to vector<1x32xf32>
    %cst_11 = arith.constant 0.000000e+00 : f32
    %28 = vector.broadcast %cst_11 : f32 to vector<1x32xf32>
    %cst_12 = arith.constant dense<0.000000e+00> : vector<1x128xf32>
    %29 = tpu.matmul %27, %24, %cst_12 {dimension_numbers = #tpu.dot_dimension_numbers<[1], [0], [0], [1], [0, 0, 1, 1], [], []>} : vector<1x32xf32>, vector<32x128xf32>, vector<1x128xf32> -> vector<1x128xf32>
    %30 = arith.addf %2, %29 : vector<1x128xf32>
    %31 = math.tanh %30 : vector<1x128xf32>
    %32 = vector.extract_strided_slice %31 {offsets = [0, 0], sizes = [1, 32], strides = [1, 1]} : vector<1x128xf32> to vector<1x32xf32>
    %cst_13 = arith.constant 5.000000e-01 : f32
    %33 = vector.broadcast %cst_13 : f32 to vector<1x32xf32>
    %34 = arith.mulf %33, %32 : vector<1x32xf32>
    %cst_14 = arith.constant 5.000000e-01 : f32
    %35 = vector.broadcast %cst_14 : f32 to vector<1x32xf32>
    %36 = arith.addf %34, %35 : vector<1x32xf32>
    %37 = vector.extract_strided_slice %31 {offsets = [0, 32], sizes = [1, 32], strides = [1, 1]} : vector<1x128xf32> to vector<1x32xf32>
    %cst_15 = arith.constant 5.000000e-01 : f32
    %38 = vector.broadcast %cst_15 : f32 to vector<1x32xf32>
    %39 = arith.mulf %38, %37 : vector<1x32xf32>
    %cst_16 = arith.constant 5.000000e-01 : f32
    %40 = vector.broadcast %cst_16 : f32 to vector<1x32xf32>
    %41 = arith.addf %39, %40 : vector<1x32xf32>
    %42 = vector.extract_strided_slice %31 {offsets = [0, 64], sizes = [1, 32], strides = [1, 1]} : vector<1x128xf32> to vector<1x32xf32>
    %43 = vector.extract_strided_slice %31 {offsets = [0, 96], sizes = [1, 32], strides = [1, 1]} : vector<1x128xf32> to vector<1x32xf32>
    %cst_17 = arith.constant 5.000000e-01 : f32
    %44 = vector.broadcast %cst_17 : f32 to vector<1x32xf32>
    %45 = arith.mulf %44, %43 : vector<1x32xf32>
    %cst_18 = arith.constant 5.000000e-01 : f32
    %46 = vector.broadcast %cst_18 : f32 to vector<1x32xf32>
    %47 = arith.addf %45, %46 : vector<1x32xf32>
    %48 = arith.mulf %41, %28 : vector<1x32xf32>
    %49 = arith.mulf %36, %42 : vector<1x32xf32>
    %50 = arith.addf %48, %49 : vector<1x32xf32>
    %51 = math.tanh %50 : vector<1x32xf32>
    %52 = arith.mulf %47, %51 : vector<1x32xf32>
    %cst_19 = arith.constant dense<0.000000e+00> : vector<1x128xf32>
    %53 = tpu.matmul %52, %24, %cst_19 {dimension_numbers = #tpu.dot_dimension_numbers<[1], [0], [0], [1], [0, 0, 1, 1], [], []>} : vector<1x32xf32>, vector<32x128xf32>, vector<1x128xf32> -> vector<1x128xf32>
    %54 = arith.addf %5, %53 : vector<1x128xf32>
    %55 = math.tanh %54 : vector<1x128xf32>
    %56 = vector.extract_strided_slice %55 {offsets = [0, 0], sizes = [1, 32], strides = [1, 1]} : vector<1x128xf32> to vector<1x32xf32>
    %cst_20 = arith.constant 5.000000e-01 : f32
    %57 = vector.broadcast %cst_20 : f32 to vector<1x32xf32>
    %58 = arith.mulf %57, %56 : vector<1x32xf32>
    %cst_21 = arith.constant 5.000000e-01 : f32
    %59 = vector.broadcast %cst_21 : f32 to vector<1x32xf32>
    %60 = arith.addf %58, %59 : vector<1x32xf32>
    %61 = vector.extract_strided_slice %55 {offsets = [0, 32], sizes = [1, 32], strides = [1, 1]} : vector<1x128xf32> to vector<1x32xf32>
    %cst_22 = arith.constant 5.000000e-01 : f32
    %62 = vector.broadcast %cst_22 : f32 to vector<1x32xf32>
    %63 = arith.mulf %62, %61 : vector<1x32xf32>
    %cst_23 = arith.constant 5.000000e-01 : f32
    %64 = vector.broadcast %cst_23 : f32 to vector<1x32xf32>
    %65 = arith.addf %63, %64 : vector<1x32xf32>
    %66 = vector.extract_strided_slice %55 {offsets = [0, 64], sizes = [1, 32], strides = [1, 1]} : vector<1x128xf32> to vector<1x32xf32>
    %67 = vector.extract_strided_slice %55 {offsets = [0, 96], sizes = [1, 32], strides = [1, 1]} : vector<1x128xf32> to vector<1x32xf32>
    %cst_24 = arith.constant 5.000000e-01 : f32
    %68 = vector.broadcast %cst_24 : f32 to vector<1x32xf32>
    %69 = arith.mulf %68, %67 : vector<1x32xf32>
    %cst_25 = arith.constant 5.000000e-01 : f32
    %70 = vector.broadcast %cst_25 : f32 to vector<1x32xf32>
    %71 = arith.addf %69, %70 : vector<1x32xf32>
    %72 = arith.mulf %65, %50 : vector<1x32xf32>
    %73 = arith.mulf %60, %66 : vector<1x32xf32>
    %74 = arith.addf %72, %73 : vector<1x32xf32>
    %75 = math.tanh %74 : vector<1x32xf32>
    %76 = arith.mulf %71, %75 : vector<1x32xf32>
    %cst_26 = arith.constant dense<0.000000e+00> : vector<1x128xf32>
    %77 = tpu.matmul %76, %24, %cst_26 {dimension_numbers = #tpu.dot_dimension_numbers<[1], [0], [0], [1], [0, 0, 1, 1], [], []>} : vector<1x32xf32>, vector<32x128xf32>, vector<1x128xf32> -> vector<1x128xf32>
    %78 = arith.addf %8, %77 : vector<1x128xf32>
    %79 = math.tanh %78 : vector<1x128xf32>
    %80 = vector.extract_strided_slice %79 {offsets = [0, 0], sizes = [1, 32], strides = [1, 1]} : vector<1x128xf32> to vector<1x32xf32>
    %cst_27 = arith.constant 5.000000e-01 : f32
    %81 = vector.broadcast %cst_27 : f32 to vector<1x32xf32>
    %82 = arith.mulf %81, %80 : vector<1x32xf32>
    %cst_28 = arith.constant 5.000000e-01 : f32
    %83 = vector.broadcast %cst_28 : f32 to vector<1x32xf32>
    %84 = arith.addf %82, %83 : vector<1x32xf32>
    %85 = vector.extract_strided_slice %79 {offsets = [0, 32], sizes = [1, 32], strides = [1, 1]} : vector<1x128xf32> to vector<1x32xf32>
    %cst_29 = arith.constant 5.000000e-01 : f32
    %86 = vector.broadcast %cst_29 : f32 to vector<1x32xf32>
    %87 = arith.mulf %86, %85 : vector<1x32xf32>
    %cst_30 = arith.constant 5.000000e-01 : f32
    %88 = vector.broadcast %cst_30 : f32 to vector<1x32xf32>
    %89 = arith.addf %87, %88 : vector<1x32xf32>
    %90 = vector.extract_strided_slice %79 {offsets = [0, 64], sizes = [1, 32], strides = [1, 1]} : vector<1x128xf32> to vector<1x32xf32>
    %91 = vector.extract_strided_slice %79 {offsets = [0, 96], sizes = [1, 32], strides = [1, 1]} : vector<1x128xf32> to vector<1x32xf32>
    %cst_31 = arith.constant 5.000000e-01 : f32
    %92 = vector.broadcast %cst_31 : f32 to vector<1x32xf32>
    %93 = arith.mulf %92, %91 : vector<1x32xf32>
    %cst_32 = arith.constant 5.000000e-01 : f32
    %94 = vector.broadcast %cst_32 : f32 to vector<1x32xf32>
    %95 = arith.addf %93, %94 : vector<1x32xf32>
    %96 = arith.mulf %89, %74 : vector<1x32xf32>
    %97 = arith.mulf %84, %90 : vector<1x32xf32>
    %98 = arith.addf %96, %97 : vector<1x32xf32>
    %99 = math.tanh %98 : vector<1x32xf32>
    %100 = arith.mulf %95, %99 : vector<1x32xf32>
    %cst_33 = arith.constant dense<0.000000e+00> : vector<1x128xf32>
    %101 = tpu.matmul %100, %24, %cst_33 {dimension_numbers = #tpu.dot_dimension_numbers<[1], [0], [0], [1], [0, 0, 1, 1], [], []>} : vector<1x32xf32>, vector<32x128xf32>, vector<1x128xf32> -> vector<1x128xf32>
    %102 = arith.addf %11, %101 : vector<1x128xf32>
    %103 = math.tanh %102 : vector<1x128xf32>
    %104 = vector.extract_strided_slice %103 {offsets = [0, 0], sizes = [1, 32], strides = [1, 1]} : vector<1x128xf32> to vector<1x32xf32>
    %cst_34 = arith.constant 5.000000e-01 : f32
    %105 = vector.broadcast %cst_34 : f32 to vector<1x32xf32>
    %106 = arith.mulf %105, %104 : vector<1x32xf32>
    %cst_35 = arith.constant 5.000000e-01 : f32
    %107 = vector.broadcast %cst_35 : f32 to vector<1x32xf32>
    %108 = arith.addf %106, %107 : vector<1x32xf32>
    %109 = vector.extract_strided_slice %103 {offsets = [0, 32], sizes = [1, 32], strides = [1, 1]} : vector<1x128xf32> to vector<1x32xf32>
    %cst_36 = arith.constant 5.000000e-01 : f32
    %110 = vector.broadcast %cst_36 : f32 to vector<1x32xf32>
    %111 = arith.mulf %110, %109 : vector<1x32xf32>
    %cst_37 = arith.constant 5.000000e-01 : f32
    %112 = vector.broadcast %cst_37 : f32 to vector<1x32xf32>
    %113 = arith.addf %111, %112 : vector<1x32xf32>
    %114 = vector.extract_strided_slice %103 {offsets = [0, 64], sizes = [1, 32], strides = [1, 1]} : vector<1x128xf32> to vector<1x32xf32>
    %115 = vector.extract_strided_slice %103 {offsets = [0, 96], sizes = [1, 32], strides = [1, 1]} : vector<1x128xf32> to vector<1x32xf32>
    %cst_38 = arith.constant 5.000000e-01 : f32
    %116 = vector.broadcast %cst_38 : f32 to vector<1x32xf32>
    %117 = arith.mulf %116, %115 : vector<1x32xf32>
    %cst_39 = arith.constant 5.000000e-01 : f32
    %118 = vector.broadcast %cst_39 : f32 to vector<1x32xf32>
    %119 = arith.addf %117, %118 : vector<1x32xf32>
    %120 = arith.mulf %113, %98 : vector<1x32xf32>
    %121 = arith.mulf %108, %114 : vector<1x32xf32>
    %122 = arith.addf %120, %121 : vector<1x32xf32>
    %123 = math.tanh %122 : vector<1x32xf32>
    %124 = arith.mulf %119, %123 : vector<1x32xf32>
    %cst_40 = arith.constant dense<0.000000e+00> : vector<1x128xf32>
    %125 = tpu.matmul %124, %24, %cst_40 {dimension_numbers = #tpu.dot_dimension_numbers<[1], [0], [0], [1], [0, 0, 1, 1], [], []>} : vector<1x32xf32>, vector<32x128xf32>, vector<1x128xf32> -> vector<1x128xf32>
    %126 = arith.addf %14, %125 : vector<1x128xf32>
    %127 = math.tanh %126 : vector<1x128xf32>
    %128 = vector.extract_strided_slice %127 {offsets = [0, 0], sizes = [1, 32], strides = [1, 1]} : vector<1x128xf32> to vector<1x32xf32>
    %cst_41 = arith.constant 5.000000e-01 : f32
    %129 = vector.broadcast %cst_41 : f32 to vector<1x32xf32>
    %130 = arith.mulf %129, %128 : vector<1x32xf32>
    %cst_42 = arith.constant 5.000000e-01 : f32
    %131 = vector.broadcast %cst_42 : f32 to vector<1x32xf32>
    %132 = arith.addf %130, %131 : vector<1x32xf32>
    %133 = vector.extract_strided_slice %127 {offsets = [0, 32], sizes = [1, 32], strides = [1, 1]} : vector<1x128xf32> to vector<1x32xf32>
    %cst_43 = arith.constant 5.000000e-01 : f32
    %134 = vector.broadcast %cst_43 : f32 to vector<1x32xf32>
    %135 = arith.mulf %134, %133 : vector<1x32xf32>
    %cst_44 = arith.constant 5.000000e-01 : f32
    %136 = vector.broadcast %cst_44 : f32 to vector<1x32xf32>
    %137 = arith.addf %135, %136 : vector<1x32xf32>
    %138 = vector.extract_strided_slice %127 {offsets = [0, 64], sizes = [1, 32], strides = [1, 1]} : vector<1x128xf32> to vector<1x32xf32>
    %139 = vector.extract_strided_slice %127 {offsets = [0, 96], sizes = [1, 32], strides = [1, 1]} : vector<1x128xf32> to vector<1x32xf32>
    %cst_45 = arith.constant 5.000000e-01 : f32
    %140 = vector.broadcast %cst_45 : f32 to vector<1x32xf32>
    %141 = arith.mulf %140, %139 : vector<1x32xf32>
    %cst_46 = arith.constant 5.000000e-01 : f32
    %142 = vector.broadcast %cst_46 : f32 to vector<1x32xf32>
    %143 = arith.addf %141, %142 : vector<1x32xf32>
    %144 = arith.mulf %137, %122 : vector<1x32xf32>
    %145 = arith.mulf %132, %138 : vector<1x32xf32>
    %146 = arith.addf %144, %145 : vector<1x32xf32>
    %147 = math.tanh %146 : vector<1x32xf32>
    %148 = arith.mulf %143, %147 : vector<1x32xf32>
    %cst_47 = arith.constant dense<0.000000e+00> : vector<1x128xf32>
    %149 = tpu.matmul %148, %24, %cst_47 {dimension_numbers = #tpu.dot_dimension_numbers<[1], [0], [0], [1], [0, 0, 1, 1], [], []>} : vector<1x32xf32>, vector<32x128xf32>, vector<1x128xf32> -> vector<1x128xf32>
    %150 = arith.addf %17, %149 : vector<1x128xf32>
    %151 = math.tanh %150 : vector<1x128xf32>
    %152 = vector.extract_strided_slice %151 {offsets = [0, 0], sizes = [1, 32], strides = [1, 1]} : vector<1x128xf32> to vector<1x32xf32>
    %cst_48 = arith.constant 5.000000e-01 : f32
    %153 = vector.broadcast %cst_48 : f32 to vector<1x32xf32>
    %154 = arith.mulf %153, %152 : vector<1x32xf32>
    %cst_49 = arith.constant 5.000000e-01 : f32
    %155 = vector.broadcast %cst_49 : f32 to vector<1x32xf32>
    %156 = arith.addf %154, %155 : vector<1x32xf32>
    %157 = vector.extract_strided_slice %151 {offsets = [0, 32], sizes = [1, 32], strides = [1, 1]} : vector<1x128xf32> to vector<1x32xf32>
    %cst_50 = arith.constant 5.000000e-01 : f32
    %158 = vector.broadcast %cst_50 : f32 to vector<1x32xf32>
    %159 = arith.mulf %158, %157 : vector<1x32xf32>
    %cst_51 = arith.constant 5.000000e-01 : f32
    %160 = vector.broadcast %cst_51 : f32 to vector<1x32xf32>
    %161 = arith.addf %159, %160 : vector<1x32xf32>
    %162 = vector.extract_strided_slice %151 {offsets = [0, 64], sizes = [1, 32], strides = [1, 1]} : vector<1x128xf32> to vector<1x32xf32>
    %163 = vector.extract_strided_slice %151 {offsets = [0, 96], sizes = [1, 32], strides = [1, 1]} : vector<1x128xf32> to vector<1x32xf32>
    %cst_52 = arith.constant 5.000000e-01 : f32
    %164 = vector.broadcast %cst_52 : f32 to vector<1x32xf32>
    %165 = arith.mulf %164, %163 : vector<1x32xf32>
    %cst_53 = arith.constant 5.000000e-01 : f32
    %166 = vector.broadcast %cst_53 : f32 to vector<1x32xf32>
    %167 = arith.addf %165, %166 : vector<1x32xf32>
    %168 = arith.mulf %161, %146 : vector<1x32xf32>
    %169 = arith.mulf %156, %162 : vector<1x32xf32>
    %170 = arith.addf %168, %169 : vector<1x32xf32>
    %171 = math.tanh %170 : vector<1x32xf32>
    %172 = arith.mulf %167, %171 : vector<1x32xf32>
    %cst_54 = arith.constant dense<0.000000e+00> : vector<1x128xf32>
    %173 = tpu.matmul %172, %24, %cst_54 {dimension_numbers = #tpu.dot_dimension_numbers<[1], [0], [0], [1], [0, 0, 1, 1], [], []>} : vector<1x32xf32>, vector<32x128xf32>, vector<1x128xf32> -> vector<1x128xf32>
    %174 = arith.addf %20, %173 : vector<1x128xf32>
    %175 = math.tanh %174 : vector<1x128xf32>
    %176 = vector.extract_strided_slice %175 {offsets = [0, 0], sizes = [1, 32], strides = [1, 1]} : vector<1x128xf32> to vector<1x32xf32>
    %cst_55 = arith.constant 5.000000e-01 : f32
    %177 = vector.broadcast %cst_55 : f32 to vector<1x32xf32>
    %178 = arith.mulf %177, %176 : vector<1x32xf32>
    %cst_56 = arith.constant 5.000000e-01 : f32
    %179 = vector.broadcast %cst_56 : f32 to vector<1x32xf32>
    %180 = arith.addf %178, %179 : vector<1x32xf32>
    %181 = vector.extract_strided_slice %175 {offsets = [0, 32], sizes = [1, 32], strides = [1, 1]} : vector<1x128xf32> to vector<1x32xf32>
    %cst_57 = arith.constant 5.000000e-01 : f32
    %182 = vector.broadcast %cst_57 : f32 to vector<1x32xf32>
    %183 = arith.mulf %182, %181 : vector<1x32xf32>
    %cst_58 = arith.constant 5.000000e-01 : f32
    %184 = vector.broadcast %cst_58 : f32 to vector<1x32xf32>
    %185 = arith.addf %183, %184 : vector<1x32xf32>
    %186 = vector.extract_strided_slice %175 {offsets = [0, 64], sizes = [1, 32], strides = [1, 1]} : vector<1x128xf32> to vector<1x32xf32>
    %187 = vector.extract_strided_slice %175 {offsets = [0, 96], sizes = [1, 32], strides = [1, 1]} : vector<1x128xf32> to vector<1x32xf32>
    %cst_59 = arith.constant 5.000000e-01 : f32
    %188 = vector.broadcast %cst_59 : f32 to vector<1x32xf32>
    %189 = arith.mulf %188, %187 : vector<1x32xf32>
    %cst_60 = arith.constant 5.000000e-01 : f32
    %190 = vector.broadcast %cst_60 : f32 to vector<1x32xf32>
    %191 = arith.addf %189, %190 : vector<1x32xf32>
    %192 = arith.mulf %185, %170 : vector<1x32xf32>
    %193 = arith.mulf %180, %186 : vector<1x32xf32>
    %194 = arith.addf %192, %193 : vector<1x32xf32>
    %195 = math.tanh %194 : vector<1x32xf32>
    %196 = arith.mulf %191, %195 : vector<1x32xf32>
    %cst_61 = arith.constant dense<0.000000e+00> : vector<1x128xf32>
    %197 = tpu.matmul %196, %24, %cst_61 {dimension_numbers = #tpu.dot_dimension_numbers<[1], [0], [0], [1], [0, 0, 1, 1], [], []>} : vector<1x32xf32>, vector<32x128xf32>, vector<1x128xf32> -> vector<1x128xf32>
    %198 = arith.addf %23, %197 : vector<1x128xf32>
    %199 = math.tanh %198 : vector<1x128xf32>
    %200 = vector.extract_strided_slice %199 {offsets = [0, 0], sizes = [1, 32], strides = [1, 1]} : vector<1x128xf32> to vector<1x32xf32>
    %cst_62 = arith.constant 5.000000e-01 : f32
    %201 = vector.broadcast %cst_62 : f32 to vector<1x32xf32>
    %202 = arith.mulf %201, %200 : vector<1x32xf32>
    %cst_63 = arith.constant 5.000000e-01 : f32
    %203 = vector.broadcast %cst_63 : f32 to vector<1x32xf32>
    %204 = arith.addf %202, %203 : vector<1x32xf32>
    %205 = vector.extract_strided_slice %199 {offsets = [0, 32], sizes = [1, 32], strides = [1, 1]} : vector<1x128xf32> to vector<1x32xf32>
    %cst_64 = arith.constant 5.000000e-01 : f32
    %206 = vector.broadcast %cst_64 : f32 to vector<1x32xf32>
    %207 = arith.mulf %206, %205 : vector<1x32xf32>
    %cst_65 = arith.constant 5.000000e-01 : f32
    %208 = vector.broadcast %cst_65 : f32 to vector<1x32xf32>
    %209 = arith.addf %207, %208 : vector<1x32xf32>
    %210 = vector.extract_strided_slice %199 {offsets = [0, 64], sizes = [1, 32], strides = [1, 1]} : vector<1x128xf32> to vector<1x32xf32>
    %211 = vector.extract_strided_slice %199 {offsets = [0, 96], sizes = [1, 32], strides = [1, 1]} : vector<1x128xf32> to vector<1x32xf32>
    %cst_66 = arith.constant 5.000000e-01 : f32
    %212 = vector.broadcast %cst_66 : f32 to vector<1x32xf32>
    %213 = arith.mulf %212, %211 : vector<1x32xf32>
    %cst_67 = arith.constant 5.000000e-01 : f32
    %214 = vector.broadcast %cst_67 : f32 to vector<1x32xf32>
    %215 = arith.addf %213, %214 : vector<1x32xf32>
    %216 = arith.mulf %209, %194 : vector<1x32xf32>
    %217 = arith.mulf %204, %210 : vector<1x32xf32>
    %218 = arith.addf %216, %217 : vector<1x32xf32>
    %219 = math.tanh %218 : vector<1x32xf32>
    %220 = arith.mulf %215, %219 : vector<1x32xf32>
    %221 = tpu.concatenate %52, %76, %100, %124, %148, %172, %196, %220 in 0 : vector<1x32xf32>, vector<1x32xf32>, vector<1x32xf32>, vector<1x32xf32>, vector<1x32xf32>, vector<1x32xf32>, vector<1x32xf32>, vector<1x32xf32> -> vector<8x32xf32>
    %cst_68 = arith.constant dense<0.000000e+00> : vector<8x128xf32>
    %222 = tpu.matmul %221, %25, %cst_68 {dimension_numbers = #tpu.dot_dimension_numbers<[1], [0], [0], [1], [0, 0, 1, 1], [], []>} : vector<8x32xf32>, vector<32x128xf32>, vector<8x128xf32> -> vector<8x128xf32>
    %223 = vector.broadcast %26 : vector<1x128xf32> to vector<8x128xf32>
    %224 = arith.addf %222, %223 : vector<8x128xf32>
    %cst_69 = arith.constant dense<0xFF800000> : vector<8xf32>
    %225 = vector.multi_reduction <maximumf>, %224, %cst_69 [1] : vector<8x128xf32> to vector<8xf32>
    %226 = vector.shape_cast %225 : vector<8xf32> to vector<8x1xf32>
    %227 = vector.broadcast %226 : vector<8x1xf32> to vector<8x128xf32>
    %228 = arith.subf %224, %227 : vector<8x128xf32>
    %229 = math.exp %228 : vector<8x128xf32>
    %cst_70 = arith.constant dense<0.000000e+00> : vector<8xf32>
    %230 = vector.multi_reduction <add>, %229, %cst_70 [1] : vector<8x128xf32> to vector<8xf32>
    %231 = vector.shape_cast %230 : vector<8xf32> to vector<8x1xf32>
    %232 = math.log %231 : vector<8x1xf32>
    %233 = vector.broadcast %232 : vector<8x1xf32> to vector<8x128xf32>
    %234 = arith.subf %228, %233 : vector<8x128xf32>
    %c0_71 = arith.constant 0 : index
    %c0_72 = arith.constant 0 : index
    %235 = vector.load %arg2[%c0_71, %c0_72] : memref<8x128xf32, #tpu.memory_space<vmem>>, vector<8x128xf32>
    tpu.vector_store %arg2[%c0_71, %c0_72], %234 {strides = array<i32>} : memref<8x128xf32, #tpu.memory_space<vmem>>, vector<8x128xf32>,
    return
  }
}

</mosaic_0001>

<llo_original>
// kernel: lstm_tagger_forward.1
$region0: #{lstm_tagger_forward.1}
  #allocation0 [shape = 'u32[]', space=smem, size = 0x4, offset = 0x4, fixed_abs, tag = 'smem constant byte address 0x4 - core index']
  #allocation1 [shape = 'u32[144,128]{1,0:T(1,128)}', space=vmem, size = 0x12000, scoped, tag = 'internal scratch']
  %s0 = inlined_call_operand.vmem [shape: s32[8], index: 0, kind: input, shape index: {}]
  %s1 = inlined_call_operand.vmem [shape: f32[88,128], index: 1, kind: input, shape index: {}]
  %s2 = inlined_call_operand.hbm [shape: f32[8,128], index: 2, kind: output, shape index: {}]
  %s3 = sld [smem:[#allocation0]]
  $region22: #{lstm_tagger_forward.1} parent=0
    _
  %s5 = ssub.s32 1, %s3
  %s6 = scalar_select 0, %s5, %s3
  $region1: #{lstm_tagger_forward.1} parent=0
    #allocation2 [shape = 'u8[512]{0}', space=smem, size = 0x200, scoped, tag = 'input window, operand 0, single buffered']
    #allocation3 [shape = 's32[1]{0}', space=sflag, size = 0x4, scoped, tag = 'scoped memory for lstm_tagger_forward.1']
    #allocation4 [shape = 's32[1]{0}', space=sflag, size = 0x4, scoped, tag = 'scoped memory for lstm_tagger_forward.1']
    #allocation5 [shape = 'u8[4096]{0}', space=vmem, size = 0x1000, scoped, tag = 'output window, operand 0, single buffered']
    %7 = vsyncpa [#allocation4], 0
    %8 = vsyncpa [#allocation3], 0
    // Predicated region
    $region2: #{lstm_tagger_forward.1} parent=1 // pred_check
      _
    $region3: #{lstm_tagger_forward.1} parent=1 // pred_check_branch
      %10 = sbr.rel (0) target = $region5
    $region4: #{lstm_tagger_forward.1} parent=1 // pred_region
      %s12 = ssub.s32 16, 16
      %13 = vsyncadd [#allocation4], %s12
      %s15 = sshll.u32 %s0, 4
      %s16 = int_to_ptr.vmem [resolvable:$true] %s15
      %18 = dma.vmem_to_smem %s16, 16, [#allocation2], [#allocation4]
    $region5: #{lstm_tagger_forward.1} parent=1 // pred_fallthru
      _
    // Predicated region
    $region6: #{lstm_tagger_forward.1} parent=1 // pred_check
      _
    $region7: #{lstm_tagger_forward.1} parent=1 // pred_check_branch
      %20 = sbr.rel (0) target = $region9
    $region8: #{lstm_tagger_forward.1} parent=1 // pred_region
      _
    $region9: #{lstm_tagger_forward.1} parent=1 // pred_fallthru
      _
    // Predicated region
    $region10: #{lstm_tagger_forward.1} parent=1 // pred_check
      _
    $region11: #{lstm_tagger_forward.1} parent=1 // pred_check_branch
      %22 = sbr.rel (0) target = $region13
    $region12: #{lstm_tagger_forward.1} parent=1 // pred_region
      %23 = dma.done [#allocation4], 16
    $region13: #{lstm_tagger_forward.1} parent=1 // pred_fallthru
      _
    %24 = sfence
    %s25 = sld [smem:[#allocation2]]
    %s26 = scalar_lea.vmem %s1, %s25
    %v27 = vld [vmem:[%s26] sm:$0x1]
    %s28 = sld [smem:[#allocation2 + $0x1]]
    %s29 = scalar_lea.vmem %s1, %s28
    %v30 = vld [vmem:[%s29] sm:$0x1]
    %s31 = sld [smem:[#allocation2 + $0x2]]
    %s32 = scalar_lea.vmem %s1, %s31
    %v33 = vld [vmem:[%s32] sm:$0x1]
    %s34 = sld [smem:[#allocation2 + $0x3]]
    %s35 = scalar_lea.vmem %s1, %s34
    %v36 = vld [vmem:[%s35] sm:$0x1]
    %s37 = sld [smem:[#allocation2 + $0x4]]
    %s38 = scalar_lea.vmem %s1, %s37
    %v39 = vld [vmem:[%s38] sm:$0x1]
    %s40 = sld [smem:[#allocation2 + $0x5]]
    %s41 = scalar_lea.vmem %s1, %s40
    %v42 = vld [vmem:[%s41] sm:$0x1]
    %s43 = sld [smem:[#allocation2 + $0x6]]
    %s44 = scalar_lea.vmem %s1, %s43
    %v45 = vld [vmem:[%s44] sm:$0x1]
    %s46 = sld [smem:[#allocation2 + $0x7]]
    %s47 = scalar_lea.vmem %s1, %s46
    %v48 = vld [vmem:[%s47] sm:$0x1]
    %v49 = vld [vmem:[%s1 + $0x10] sm:$0xff]
    %v50 = vld [vmem:[%s1 + $0x18] sm:$0xff]
    %v51 = vld [vmem:[%s1 + $0x20] sm:$0xff]
    %v52 = vld [vmem:[%s1 + $0x28] sm:$0xff]
    %v53 = vld [vmem:[%s1 + $0x30] sm:$0xff]
    %v54 = vld [vmem:[%s1 + $0x38] sm:$0xff]
    %v55 = vld [vmem:[%s1 + $0x40] sm:$0xff]
    %v56 = vld [vmem:[%s1 + $0x48] sm:$0xff]
    %v57 = vld [vmem:[%s1 + $0x50] sm:$0x1]
    %vm58 = vcmask 261120
    %v60 = vsel %vm58, 0.0, 0
    %62 = vmatprep.subr.mxu0 0.0
    %63 = vmatpush1.msra.mxu0 %v49
    %64 = vmatprep.subr.mxu0 0.0
    %65 = vmatpush1.msra.mxu0 %v50
    %66 = vmatprep.subr.mxu0 0.0
    %67 = vmatpush1.msra.mxu0 %v51
    %68 = vmatprep.subr.mxu0 0.0
    %69 = vmatpush1.msra.mxu0 %v52
    %70 = vmatprep.subr.mxu0 0.0
    %71 = vmatpush1.msra.mxu0 0.0
    %72 = vmatprep.subr.mxu0 0.0
    %73 = vmatpush1.msra.mxu0 0.0
    %74 = vmatprep.subr.mxu0 0.0
    %75 = vmatpush1.msra.mxu0 0.0
    %76 = vmatprep.subr.mxu0 0.0
    %77 = vmatpush1.msra.mxu0 0.0
    %78 = vmatprep.subr.mxu0 0.0
    %79 = vmatpush1.msra.mxu0 0.0
    %80 = vmatprep.subr.mxu0 0.0
    %81 = vmatpush1.msra.mxu0 0.0
    %82 = vmatprep.subr.mxu0 0.0
    %83 = vmatpush1.msra.mxu0 0.0
    %84 = vmatprep.subr.mxu0 0.0
    %85 = vmatpush1.msra.mxu0 0.0
    %86 = vmatprep.subr.mxu0 0.0
    %87 = vmatpush1.msra.mxu0 0.0
    %88 = vmatprep.subr.mxu0 0.0
    %89 = vmatpush1.msra.mxu0 0.0
    %90 = vmatprep.subr.mxu0 0.0
    %91 = vmatpush1.msra.mxu0 0.0
    %92 = vmatprep.subr.mxu0 0.0
    %93 = vmatpush1.msra.mxu0 0.0
    %94 = vmatprep.subr.mxu0 0.0
    %95 = vmatpush1.msra.mxu0 0.0
    %96 = vmatprep.subr.mxu0 0.0
    %97 = vmatpush1.msra.mxu0 0.0
    %98 = vmatprep.subr.mxu0 0.0
    %99 = vmatpush1.msra.mxu0 0.0
    %100 = vmatprep.subr.mxu0 0.0
    %101 = vmatpush1.msra.mxu0 0.0
    %102 = vmatprep.subr.mxu0 0.0
    %103 = vmatpush1.msra.mxu0 0.0
    %104 = vmatprep.subr.mxu0 0.0
    %105 = vmatpush1.msra.mxu0 0.0
    %106 = vmatprep.subr.mxu0 0.0
    %107 = vmatpush1.msra.mxu0 0.0
    %108 = vmatprep.subr.mxu0 0.0
    %109 = vmatpush1.msra.mxu0 0.0
    %110 = vmatprep.subr.mxu0 0.0
    %111 = vmatpush1.msra.mxu0 0.0
    %112 = vmatprep.subr.mxu0 0.0
    %113 = vmatpush1.msra.mxu0 0.0
    %114 = vmatprep.subr.mxu0 0.0
    %115 = vmatpush1.msra.mxu0 0.0
    %116 = vmatprep.subr.mxu0 0.0
    %117 = vmatpush1.msra.mxu0 0.0
    %118 = vmatprep.subr.mxu0 0.0
    %119 = vmatpush1.msra.mxu0 0.0
    %120 = vmatprep.subr.mxu0 0.0
    %121 = vmatpush1.msra.mxu0 0.0
    %122 = vmatprep.subr.mxu0 0.0
    %123 = vmatpush1.msra.mxu0 0.0
    %124 = vmatprep.subr.mxu0 0.0
    %125 = vmatpush1.msra.mxu0 0.0
    %126 = vmatprep.mubr.f32.mxu0 0.0
    %127 = vmatmul.mubr.f32.gmra.mrb[0].mxu0 %v60
    %v128 = vpop.f32.mrb[0].mxu0
    %v129 = vadd.f32 0.0, %v128
    %v130 = vpop.f32.mrb[0].mxu0
    %131 = vdwg.mxu0
    %v132 = vadd.f32 %v27, %v129
    %v133 = vtanh.pop %v132
    %v134 = vmul.f32 %v133, 0.5
    %v135 = vadd.f32 %v134, 0.5
    %v136 = vmul.f32 %v135, 0.0
    %138 = vrot.lane.b32.xlu0 %v133, 64
    %v139 = vpop.permute.xlu0 %138
    %v141 = vmul.f32 %v135, %v139
    %143 = vrot.lane.b32.xlu0 %v141, 32
    %v144 = vpop.permute.xlu0 %143
    %v146 = vadd.f32 %v136, %v144
    %v147 = vtanh.pop %v146
    %149 = vrot.lane.b32.xlu0 %v147, 64
    %v150 = vpop.permute.xlu0 %149
    %v152 = vmul.f32 %v135, %v150
    %154 = vrot.lane.b32.xlu0 %v152, 32
    %v155 = vpop.permute.xlu0 %154
    %v156 = vsel %vm58, %v155, 0
    %158 = vmatprep.subr.mxu0 0.0
    %159 = vmatpush1.msra.mxu0 %v49
    %160 = vmatprep.subr.mxu0 0.0
    %161 = vmatpush1.msra.mxu0 %v50
    %162 = vmatprep.subr.mxu0 0.0
    %163 = vmatpush1.msra.mxu0 %v51
    %164 = vmatprep.subr.mxu0 0.0
    %165 = vmatpush1.msra.mxu0 %v52
    %166 = vmatprep.subr.mxu0 0.0
    %167 = vmatpush1.msra.mxu0 0.0
    %168 = vmatprep.subr.mxu0 0.0
    %169 = vmatpush1.msra.mxu0 0.0
    %170 = vmatprep.subr.mxu0 0.0
    %171 = vmatpush1.msra.mxu0 0.0
    %172 = vmatprep.subr.mxu0 0.0
    %173 = vmatpush1.msra.mxu0 0.0
    %174 = vmatprep.subr.mxu0 0.0
    %175 = vmatpush1.msra.mxu0 0.0
    %176 = vmatprep.subr.mxu0 0.0
    %177 = vmatpush1.msra.mxu0 0.0
    %178 = vmatprep.subr.mxu0 0.0
    %179 = vmatpush1.msra.mxu0 0.0
    %180 = vmatprep.subr.mxu0 0.0
    %181 = vmatpush1.msra.mxu0 0.0
    %182 = vmatprep.subr.mxu0 0.0
    %183 = vmatpush1.msra.mxu0 0.0
    %184 = vmatprep.subr.mxu0 0.0
    %185 = vmatpush1.msra.mxu0 0.0
    %186 = vmatprep.subr.mxu0 0.0
    %187 = vmatpush1.msra.mxu0 0.0
    %188 = vmatprep.subr.mxu0 0.0
    %189 = vmatpush1.msra.mxu0 0.0
    %190 = vmatprep.subr.mxu0 0.0
    %191 = vmatpush1.msra.mxu0 0.0
    %192 = vmatprep.subr.mxu0 0.0
    %193 = vmatpush1.msra.mxu0 0.0
    %194 = vmatprep.subr.mxu0 0.0
    %195 = vmatpush1.msra.mxu0 0.0
    %196 = vmatprep.subr.mxu0 0.0
    %197 = vmatpush1.msra.mxu0 0.0
    %198 = vmatprep.subr.mxu0 0.0
    %199 = vmatpush1.msra.mxu0 0.0
    %200 = vmatprep.subr.mxu0 0.0
    %201 = vmatpush1.msra.mxu0 0.0
    %202 = vmatprep.subr.mxu0 0.0
    %203 = vmatpush1.msra.mxu0 0.0
    %204 = vmatprep.subr.mxu0 0.0
    %205 = vmatpush1.msra.mxu0 0.0
    %206 = vmatprep.subr.mxu0 0.0
    %207 = vmatpush1.msra.mxu0 0.0
    %208 = vmatprep.subr.mxu0 0.0
    %209 = vmatpush1.msra.mxu0 0.0
    %210 = vmatprep.subr.mxu0 0.0
    %211 = vmatpush1.msra.mxu0 0.0
    %212 = vmatprep.subr.mxu0 0.0
    %213 = vmatpush1.msra.mxu0 0.0
    %214 = vmatprep.subr.mxu0 0.0
    %215 = vmatpush1.msra.mxu0 0.0
    %216 = vmatprep.subr.mxu0 0.0
    %217 = vmatpush1.msra.mxu0 0.0
    %218 = vmatprep.subr.mxu0 0.0
    %219 = vmatpush1.msra.mxu0 0.0
    %220 = vmatprep.subr.mxu0 0.0
    %221 = vmatpush1.msra.mxu0 0.0
    %222 = vmatprep.mubr.f32.mxu0 0.0
    %223 = vmatmul.mubr.f32.gmra.mrb[0].mxu0 %v156
    %v224 = vpop.f32.mrb[0].mxu0
    %v225 = vadd.f32 0.0, %v224
    %v226 = vpop.f32.mrb[0].mxu0
    %227 = vdwg.mxu0
    %v228 = vadd.f32 %v30, %v225
    %v229 = vtanh.pop %v228
    %v230 = vmul.f32 %v229, 0.5
    %v231 = vadd.f32 %v230, 0.5
    %v232 = vmul.f32 %v231, %v146
    %234 = vrot.lane.b32.xlu0 %v229, 64
    %v235 = vpop.permute.xlu0 %234
    %v237 = vmul.f32 %v231, %v235
    %239 = vrot.lane.b32.xlu0 %v237, 32
    %v240 = vpop.permute.xlu0 %239
    %v242 = vadd.f32 %v232, %v240
    %v243 = vtanh.pop %v242
    %245 = vrot.lane.b32.xlu0 %v243, 64
    %v246 = vpop.permute.xlu0 %245
    %v248 = vmul.f32 %v231, %v246
    %250 = vrot.lane.b32.xlu0 %v248, 32
    %v251 = vpop.permute.xlu0 %250
    %v252 = vsel %vm58, %v251, 0
    %254 = vmatprep.subr.mxu0 0.0
    %255 = vmatpush1.msra.mxu0 %v49
    %256 = vmatprep.subr.mxu0 0.0
    %257 = vmatpush1.msra.mxu0 %v50
    %258 = vmatprep.subr.mxu0 0.0
    %259 = vmatpush1.msra.mxu0 %v51
    %260 = vmatprep.subr.mxu0 0.0
    %261 = vmatpush1.msra.mxu0 %v52
    %262 = vmatprep.subr.mxu0 0.0
    %263 = vmatpush1.msra.mxu0 0.0
    %264 = vmatprep.subr.mxu0 0.0
    %265 = vmatpush1.msra.mxu0 0.0
    %266 = vmatprep.subr.mxu0 0.0
    %267 = vmatpush1.msra.mxu0 0.0
    %268 = vmatprep.subr.mxu0 0.0
    %269 = vmatpush1.msra.mxu0 0.0
    %270 = vmatprep.subr.mxu0 0.0
    %271 = vmatpush1.msra.mxu0 0.0
    %272 = vmatprep.subr.mxu0 0.0
    %273 = vmatpush1.msra.mxu0 0.0
    %274 = vmatprep.subr.mxu0 0.0
    %275 = vmatpush1.msra.mxu0 0.0
    %276 = vmatprep.subr.mxu0 0.0
    %277 = vmatpush1.msra.mxu0 0.0
    %278 = vmatprep.subr.mxu0 0.0
    %279 = vmatpush1.msra.mxu0 0.0
    %280 = vmatprep.subr.mxu0 0.0
    %281 = vmatpush1.msra.mxu0 0.0
    %282 = vmatprep.subr.mxu0 0.0
    %283 = vmatpush1.msra.mxu0 0.0
    %284 = vmatprep.subr.mxu0 0.0
    %285 = vmatpush1.msra.mxu0 0.0
    %286 = vmatprep.subr.mxu0 0.0
    %287 = vmatpush1.msra.mxu0 0.0
    %288 = vmatprep.subr.mxu0 0.0
    %289 = vmatpush1.msra.mxu0 0.0
    %290 = vmatprep.subr.mxu0 0.0
    %291 = vmatpush1.msra.mxu0 0.0
    %292 = vmatprep.subr.mxu0 0.0
    %293 = vmatpush1.msra.mxu0 0.0
    %294 = vmatprep.subr.mxu0 0.0
    %295 = vmatpush1.msra.mxu0 0.0
    %296 = vmatprep.subr.mxu0 0.0
    %297 = vmatpush1.msra.mxu0 0.0
    %298 = vmatprep.subr.mxu0 0.0
    %299 = vmatpush1.msra.mxu0 0.0
    %300 = vmatprep.subr.mxu0 0.0
    %301 = vmatpush1.msra.mxu0 0.0
    %302 = vmatprep.subr.mxu0 0.0
    %303 = vmatpush1.msra.mxu0 0.0
    %304 = vmatprep.subr.mxu0 0.0
    %305 = vmatpush1.msra.mxu0 0.0
    %306 = vmatprep.subr.mxu0 0.0
    %307 = vmatpush1.msra.mxu0 0.0
    %308 = vmatprep.subr.mxu0 0.0
    %309 = vmatpush1.msra.mxu0 0.0
    %310 = vmatprep.subr.mxu0 0.0
    %311 = vmatpush1.msra.mxu0 0.0
    %312 = vmatprep.subr.mxu0 0.0
    %313 = vmatpush1.msra.mxu0 0.0
    %314 = vmatprep.subr.mxu0 0.0
    %315 = vmatpush1.msra.mxu0 0.0
    %316 = vmatprep.subr.mxu0 0.0
    %317 = vmatpush1.msra.mxu0 0.0
    %318 = vmatprep.mubr.f32.mxu0 0.0
    %319 = vmatmul.mubr.f32.gmra.mrb[0].mxu0 %v252
    %v320 = vpop.f32.mrb[0].mxu0
    %v321 = vadd.f32 0.0, %v320
    %v322 = vpop.f32.mrb[0].mxu0
    %323 = vdwg.mxu0
    %v324 = vadd.f32 %v33, %v321
    %v325 = vtanh.pop %v324
    %v326 = vmul.f32 %v325, 0.5
    %v327 = vadd.f32 %v326, 0.5
    %v328 = vmul.f32 %v327, %v242
    %330 = vrot.lane.b32.xlu0 %v325, 64
    %v331 = vpop.permute.xlu0 %330
    %v333 = vmul.f32 %v327, %v331
    %335 = vrot.lane.b32.xlu0 %v333, 32
    %v336 = vpop.permute.xlu0 %335
    %v338 = vadd.f32 %v328, %v336
    %v339 = vtanh.pop %v338
    %341 = vrot.lane.b32.xlu0 %v339, 64
    %v342 = vpop.permute.xlu0 %341
    %v344 = vmul.f32 %v327, %v342
    %346 = vrot.lane.b32.xlu0 %v344, 32
    %v347 = vpop.permute.xlu0 %346
    %v348 = vsel %vm58, %v347, 0
    %350 = vmatprep.subr.mxu0 0.0
    %351 = vmatpush1.msra.mxu0 %v49
    %352 = vmatprep.subr.mxu0 0.0
    %353 = vmatpush1.msra.mxu0 %v50
    %354 = vmatprep.subr.mxu0 0.0
    %355 = vmatpush1.msra.mxu0 %v51
    %356 = vmatprep.subr.mxu0 0.0
    %357 = vmatpush1.msra.mxu0 %v52
    %358 = vmatprep.subr.mxu0 0.0
    %359 = vmatpush1.msra.mxu0 0.0
    %360 = vmatprep.subr.mxu0 0.0
    %361 = vmatpush1.msra.mxu0 0.0
    %362 = vmatprep.subr.mxu0 0.0
    %363 = vmatpush1.msra.mxu0 0.0
    %364 = vmatprep.subr.mxu0 0.0
    %365 = vmatpush1.msra.mxu0 0.0
    %366 = vmatprep.subr.mxu0 0.0
    %367 = vmatpush1.msra.mxu0 0.0
    %368 = vmatprep.subr.mxu0 0.0
    %369 = vmatpush1.msra.mxu0 0.0
    %370 = vmatprep.subr.mxu0 0.0
    %371 = vmatpush1.msra.mxu0 0.0
    %372 = vmatprep.subr.mxu0 0.0
    %373 = vmatpush1.msra.mxu0 0.0
    %374 = vmatprep.subr.mxu0 0.0
    %375 = vmatpush1.msra.mxu0 0.0
    %376 = vmatprep.subr.mxu0 0.0
    %377 = vmatpush1.msra.mxu0 0.0
    %378 = vmatprep.subr.mxu0 0.0
    %379 = vmatpush1.msra.mxu0 0.0
    %380 = vmatprep.subr.mxu0 0.0
    %381 = vmatpush1.msra.mxu0 0.0
    %382 = vmatprep.subr.mxu0 0.0
    %383 = vmatpush1.msra.mxu0 0.0
    %384 = vmatprep.subr.mxu0 0.0
    %385 = vmatpush1.msra.mxu0 0.0
    %386 = vmatprep.subr.mxu0 0.0
    %387 = vmatpush1.msra.mxu0 0.0
    %388 = vmatprep.subr.mxu0 0.0
    %389 = vmatpush1.msra.mxu0 0.0
    %390 = vmatprep.subr.mxu0 0.0
    %391 = vmatpush1.msra.mxu0 0.0
    %392 = vmatprep.subr.mxu0 0.0
    %393 = vmatpush1.msra.mxu0 0.0
    %394 = vmatprep.subr.mxu0 0.0
    %395 = vmatpush1.msra.mxu0 0.0
    %396 = vmatprep.subr.mxu0 0.0
    %397 = vmatpush1.msra.mxu0 0.0
    %398 = vmatprep.subr.mxu0 0.0
    %399 = vmatpush1.msra.mxu0 0.0
    %400 = vmatprep.subr.mxu0 0.0
    %401 = vmatpush1.msra.mxu0 0.0
    %402 = vmatprep.subr.mxu0 0.0
    %403 = vmatpush1.msra.mxu0 0.0
    %404 = vmatprep.subr.mxu0 0.0
    %405 = vmatpush1.msra.mxu0 0.0
    %406 = vmatprep.subr.mxu0 0.0
    %407 = vmatpush1.msra.mxu0 0.0
    %408 = vmatprep.subr.mxu0 0.0
    %409 = vmatpush1.msra.mxu0 0.0
    %410 = vmatprep.subr.mxu0 0.0
    %411 = vmatpush1.msra.mxu0 0.0
    %412 = vmatprep.subr.mxu0 0.0
    %413 = vmatpush1.msra.mxu0 0.0
    %414 = vmatprep.mubr.f32.mxu0 0.0
    %415 = vmatmul.mubr.f32.gmra.mrb[0].mxu0 %v348
    %v416 = vpop.f32.mrb[0].mxu0
    %v417 = vadd.f32 0.0, %v416
    %v418 = vpop.f32.mrb[0].mxu0
    %419 = vdwg.mxu0
    %v420 = vadd.f32 %v36, %v417
    %v421 = vtanh.pop %v420
    %v422 = vmul.f32 %v421, 0.5
    %v423 = vadd.f32 %v422, 0.5
    %v424 = vmul.f32 %v423, %v338
    %426 = vrot.lane.b32.xlu0 %v421, 64
    %v427 = vpop.permute.xlu0 %426
    %v429 = vmul.f32 %v423, %v427
    %431 = vrot.lane.b32.xlu0 %v429, 32
    %v432 = vpop.permute.xlu0 %431
    %v434 = vadd.f32 %v424, %v432
    %v435 = vtanh.pop %v434
    %437 = vrot.lane.b32.xlu0 %v435, 64
    %v438 = vpop.permute.xlu0 %437
    %v440 = vmul.f32 %v423, %v438
    %442 = vrot.lane.b32.xlu0 %v440, 32
    %v443 = vpop.permute.xlu0 %442
    %v444 = vsel %vm58, %v443, 0
    %446 = vmatprep.subr.mxu0 0.0
    %447 = vmatpush1.msra.mxu0 %v49
    %448 = vmatprep.subr.mxu0 0.0
    %449 = vmatpush1.msra.mxu0 %v50
    %450 = vmatprep.subr.mxu0 0.0
    %451 = vmatpush1.msra.mxu0 %v51
    %452 = vmatprep.subr.mxu0 0.0
    %453 = vmatpush1.msra.mxu0 %v52
    %454 = vmatprep.subr.mxu0 0.0
    %455 = vmatpush1.msra.mxu0 0.0
    %456 = vmatprep.subr.mxu0 0.0
    %457 = vmatpush1.msra.mxu0 0.0
    %458 = vmatprep.subr.mxu0 0.0
    %459 = vmatpush1.msra.mxu0 0.0
    %460 = vmatprep.subr.mxu0 0.0
    %461 = vmatpush1.msra.mxu0 0.0
    %462 = vmatprep.subr.mxu0 0.0
    %463 = vmatpush1.msra.mxu0 0.0
    %464 = vmatprep.subr.mxu0 0.0
    %465 = vmatpush1.msra.mxu0 0.0
    %466 = vmatprep.subr.mxu0 0.0
    %467 = vmatpush1.msra.mxu0 0.0
    %468 = vmatprep.subr.mxu0 0.0
    %469 = vmatpush1.msra.mxu0 0.0
    %470 = vmatprep.subr.mxu0 0.0
    %471 = vmatpush1.msra.mxu0 0.0
    %472 = vmatprep.subr.mxu0 0.0
    %473 = vmatpush1.msra.mxu0 0.0
    %474 = vmatprep.subr.mxu0 0.0
    %475 = vmatpush1.msra.mxu0 0.0
    %476 = vmatprep.subr.mxu0 0.0
    %477 = vmatpush1.msra.mxu0 0.0
    %478 = vmatprep.subr.mxu0 0.0
    %479 = vmatpush1.msra.mxu0 0.0
    %480 = vmatprep.subr.mxu0 0.0
    %481 = vmatpush1.msra.mxu0 0.0
    %482 = vmatprep.subr.mxu0 0.0
    %483 = vmatpush1.msra.mxu0 0.0
    %484 = vmatprep.subr.mxu0 0.0
    %485 = vmatpush1.msra.mxu0 0.0
    %486 = vmatprep.subr.mxu0 0.0
    %487 = vmatpush1.msra.mxu0 0.0
    %488 = vmatprep.subr.mxu0 0.0
    %489 = vmatpush1.msra.mxu0 0.0
    %490 = vmatprep.subr.mxu0 0.0
    %491 = vmatpush1.msra.mxu0 0.0
    %492 = vmatprep.subr.mxu0 0.0
    %493 = vmatpush1.msra.mxu0 0.0
    %494 = vmatprep.subr.mxu0 0.0
    %495 = vmatpush1.msra.mxu0 0.0
    %496 = vmatprep.subr.mxu0 0.0
    %497 = vmatpush1.msra.mxu0 0.0
    %498 = vmatprep.subr.mxu0 0.0
    %499 = vmatpush1.msra.mxu0 0.0
    %500 = vmatprep.subr.mxu0 0.0
    %501 = vmatpush1.msra.mxu0 0.0
    %502 = vmatprep.subr.mxu0 0.0
    %503 = vmatpush1.msra.mxu0 0.0
    %504 = vmatprep.subr.mxu0 0.0
    %505 = vmatpush1.msra.mxu0 0.0
    %506 = vmatprep.subr.mxu0 0.0
    %507 = vmatpush1.msra.mxu0 0.0
    %508 = vmatprep.subr.mxu0 0.0
    %509 = vmatpush1.msra.mxu0 0.0
    %510 = vmatprep.mubr.f32.mxu0 0.0
    %511 = vmatmul.mubr.f32.gmra.mrb[0].mxu0 %v444
    %v512 = vpop.f32.mrb[0].mxu0
    %v513 = vadd.f32 0.0, %v512
    %v514 = vpop.f32.mrb[0].mxu0
    %515 = vdwg.mxu0
    %v516 = vadd.f32 %v39, %v513
    %v517 = vtanh.pop %v516
    %v518 = vmul.f32 %v517, 0.5
    %v519 = vadd.f32 %v518, 0.5
    %v520 = vmul.f32 %v519, %v434
    %522 = vrot.lane.b32.xlu0 %v517, 64
    %v523 = vpop.permute.xlu0 %522
    %v525 = vmul.f32 %v519, %v523
    %527 = vrot.lane.b32.xlu0 %v525, 32
    %v528 = vpop.permute.xlu0 %527
    %v530 = vadd.f32 %v520, %v528
    %v531 = vtanh.pop %v530
    %533 = vrot.lane.b32.xlu0 %v531, 64
    %v534 = vpop.permute.xlu0 %533
    %v536 = vmul.f32 %v519, %v534
    %538 = vrot.lane.b32.xlu0 %v536, 32
    %v539 = vpop.permute.xlu0 %538
    %v540 = vsel %vm58, %v539, 0
    %542 = vmatprep.subr.mxu0 0.0
    %543 = vmatpush1.msra.mxu0 %v49
    %544 = vmatprep.subr.mxu0 0.0
    %545 = vmatpush1.msra.mxu0 %v50
    %546 = vmatprep.subr.mxu0 0.0
    %547 = vmatpush1.msra.mxu0 %v51
    %548 = vmatprep.subr.mxu0 0.0
    %549 = vmatpush1.msra.mxu0 %v52
    %550 = vmatprep.subr.mxu0 0.0
    %551 = vmatpush1.msra.mxu0 0.0
    %552 = vmatprep.subr.mxu0 0.0
    %553 = vmatpush1.msra.mxu0 0.0
    %554 = vmatprep.subr.mxu0 0.0
    %555 = vmatpush1.msra.mxu0 0.0
    %556 = vmatprep.subr.mxu0 0.0
    %557 = vmatpush1.msra.mxu0 0.0
    %558 = vmatprep.subr.mxu0 0.0
    %559 = vmatpush1.msra.mxu0 0.0
    %560 = vmatprep.subr.mxu0 0.0
    %561 = vmatpush1.msra.mxu0 0.0
    %562 = vmatprep.subr.mxu0 0.0
    %563 = vmatpush1.msra.mxu0 0.0
    %564 = vmatprep.subr.mxu0 0.0
    %565 = vmatpush1.msra.mxu0 0.0
    %566 = vmatprep.subr.mxu0 0.0
    %567 = vmatpush1.msra.mxu0 0.0
    %568 = vmatprep.subr.mxu0 0.0
    %569 = vmatpush1.msra.mxu0 0.0
    %570 = vmatprep.subr.mxu0 0.0
    %571 = vmatpush1.msra.mxu0 0.0
    %572 = vmatprep.subr.mxu0 0.0
    %573 = vmatpush1.msra.mxu0 0.0
    %574 = vmatprep.subr.mxu0 0.0
    %575 = vmatpush1.msra.mxu0 0.0
    %576 = vmatprep.subr.mxu0 0.0
    %577 = vmatpush1.msra.mxu0 0.0
    %578 = vmatprep.subr.mxu0 0.0
    %579 = vmatpush1.msra.mxu0 0.0
    %580 = vmatprep.subr.mxu0 0.0
    %581 = vmatpush1.msra.mxu0 0.0
    %582 = vmatprep.subr.mxu0 0.0
    %583 = vmatpush1.msra.mxu0 0.0
    %584 = vmatprep.subr.mxu0 0.0
    %585 = vmatpush1.msra.mxu0 0.0
    %586 = vmatprep.subr.mxu0 0.0
    %587 = vmatpush1.msra.mxu0 0.0
    %588 = vmatprep.subr.mxu0 0.0
    %589 = vmatpush1.msra.mxu0 0.0
    %590 = vmatprep.subr.mxu0 0.0
    %591 = vmatpush1.msra.mxu0 0.0
    %592 = vmatprep.subr.mxu0 0.0
    %593 = vmatpush1.msra.mxu0 0.0
    %594 = vmatprep.subr.mxu0 0.0
    %595 = vmatpush1.msra.mxu0 0.0
    %596 = vmatprep.subr.mxu0 0.0
    %597 = vmatpush1.msra.mxu0 0.0
    %598 = vmatprep.subr.mxu0 0.0
    %599 = vmatpush1.msra.mxu0 0.0
    %600 = vmatprep.subr.mxu0 0.0
    %601 = vmatpush1.msra.mxu0 0.0
    %602 = vmatprep.subr.mxu0 0.0
    %603 = vmatpush1.msra.mxu0 0.0
    %604 = vmatprep.subr.mxu0 0.0
    %605 = vmatpush1.msra.mxu0 0.0
    %606 = vmatprep.mubr.f32.mxu0 0.0
    %607 = vmatmul.mubr.f32.gmra.mrb[0].mxu0 %v540
    %v608 = vpop.f32.mrb[0].mxu0
    %v609 = vadd.f32 0.0, %v608
    %v610 = vpop.f32.mrb[0].mxu0
    %611 = vdwg.mxu0
    %v612 = vadd.f32 %v42, %v609
    %v613 = vtanh.pop %v612
    %v614 = vmul.f32 %v613, 0.5
    %v615 = vadd.f32 %v614, 0.5
    %v616 = vmul.f32 %v615, %v530
    %618 = vrot.lane.b32.xlu0 %v613, 64
    %v619 = vpop.permute.xlu0 %618
    %v621 = vmul.f32 %v615, %v619
    %623 = vrot.lane.b32.xlu0 %v621, 32
    %v624 = vpop.permute.xlu0 %623
    %v626 = vadd.f32 %v616, %v624
    %v627 = vtanh.pop %v626
    %629 = vrot.lane.b32.xlu0 %v627, 64
    %v630 = vpop.permute.xlu0 %629
    %v632 = vmul.f32 %v615, %v630
    %634 = vrot.lane.b32.xlu0 %v632, 32
    %v635 = vpop.permute.xlu0 %634
    %v636 = vsel %vm58, %v635, 0
    %638 = vmatprep.subr.mxu0 0.0
    %639 = vmatpush1.msra.mxu0 %v49
    %640 = vmatprep.subr.mxu0 0.0
    %641 = vmatpush1.msra.mxu0 %v50
    %642 = vmatprep.subr.mxu0 0.0
    %643 = vmatpush1.msra.mxu0 %v51
    %644 = vmatprep.subr.mxu0 0.0
    %645 = vmatpush1.msra.mxu0 %v52
    %646 = vmatprep.subr.mxu0 0.0
    %647 = vmatpush1.msra.mxu0 0.0
    %648 = vmatprep.subr.mxu0 0.0
    %649 = vmatpush1.msra.mxu0 0.0
    %650 = vmatprep.subr.mxu0 0.0
    %651 = vmatpush1.msra.mxu0 0.0
    %652 = vmatprep.subr.mxu0 0.0
    %653 = vmatpush1.msra.mxu0 0.0
    %654 = vmatprep.subr.mxu0 0.0
    %655 = vmatpush1.msra.mxu0 0.0
    %656 = vmatprep.subr.mxu0 0.0
    %657 = vmatpush1.msra.mxu0 0.0
    %658 = vmatprep.subr.mxu0 0.0
    %659 = vmatpush1.msra.mxu0 0.0
    %660 = vmatprep.subr.mxu0 0.0
    %661 = vmatpush1.msra.mxu0 0.0
    %662 = vmatprep.subr.mxu0 0.0
    %663 = vmatpush1.msra.mxu0 0.0
    %664 = vmatprep.subr.mxu0 0.0
    %665 = vmatpush1.msra.mxu0 0.0
    %666 = vmatprep.subr.mxu0 0.0
    %667 = vmatpush1.msra.mxu0 0.0
    %668 = vmatprep.subr.mxu0 0.0
    %669 = vmatpush1.msra.mxu0 0.0
    %670 = vmatprep.subr.mxu0 0.0
    %671 = vmatpush1.msra.mxu0 0.0
    %672 = vmatprep.subr.mxu0 0.0
    %673 = vmatpush1.msra.mxu0 0.0
    %674 = vmatprep.subr.mxu0 0.0
    %675 = vmatpush1.msra.mxu0 0.0
    %676 = vmatprep.subr.mxu0 0.0
    %677 = vmatpush1.msra.mxu0 0.0
    %678 = vmatprep.subr.mxu0 0.0
    %679 = vmatpush1.msra.mxu0 0.0
    %680 = vmatprep.subr.mxu0 0.0
    %681 = vmatpush1.msra.mxu0 0.0
    %682 = vmatprep.subr.mxu0 0.0
    %683 = vmatpush1.msra.mxu0 0.0
    %684 = vmatprep.subr.mxu0 0.0
    %685 = vmatpush1.msra.mxu0 0.0
    %686 = vmatprep.subr.mxu0 0.0
    %687 = vmatpush1.msra.mxu0 0.0
    %688 = vmatprep.subr.mxu0 0.0
    %689 = vmatpush1.msra.mxu0 0.0
    %690 = vmatprep.subr.mxu0 0.0
    %691 = vmatpush1.msra.mxu0 0.0
    %692 = vmatprep.subr.mxu0 0.0
    %693 = vmatpush1.msra.mxu0 0.0
    %694 = vmatprep.subr.mxu0 0.0
    %695 = vmatpush1.msra.mxu0 0.0
    %696 = vmatprep.subr.mxu0 0.0
    %697 = vmatpush1.msra.mxu0 0.0
    %698 = vmatprep.subr.mxu0 0.0
    %699 = vmatpush1.msra.mxu0 0.0
    %700 = vmatprep.subr.mxu0 0.0
    %701 = vmatpush1.msra.mxu0 0.0
    %702 = vmatprep.mubr.f32.mxu0 0.0
    %703 = vmatmul.mubr.f32.gmra.mrb[0].mxu0 %v636
    %v704 = vpop.f32.mrb[0].mxu0
    %v705 = vadd.f32 0.0, %v704
    %v706 = vpop.f32.mrb[0].mxu0
    %707 = vdwg.mxu0
    %v708 = vadd.f32 %v45, %v705
    %v709 = vtanh.pop %v708
    %v710 = vmul.f32 %v709, 0.5
    %v711 = vadd.f32 %v710, 0.5
    %v712 = vmul.f32 %v711, %v626
    %714 = vrot.lane.b32.xlu0 %v709, 64
    %v715 = vpop.permute.xlu0 %714
    %v717 = vmul.f32 %v711, %v715
    %719 = vrot.lane.b32.xlu0 %v717, 32
    %v720 = vpop.permute.xlu0 %719
    %v722 = vadd.f32 %v712, %v720
    %v723 = vtanh.pop %v722
    %725 = vrot.lane.b32.xlu0 %v723, 64
    %v726 = vpop.permute.xlu0 %725
    %v728 = vmul.f32 %v711, %v726
    %730 = vrot.lane.b32.xlu0 %v728, 32
    %v731 = vpop.permute.xlu0 %730
    %v732 = vsel %vm58, %v731, 0
    %734 = vmatprep.subr.mxu0 0.0
    %735 = vmatpush1.msra.mxu0 %v49
    %736 = vmatprep.subr.mxu0 0.0
    %737 = vmatpush1.msra.mxu0 %v50
    %738 = vmatprep.subr.mxu0 0.0
    %739 = vmatpush1.msra.mxu0 %v51
    %740 = vmatprep.subr.mxu0 0.0
    %741 = vmatpush1.msra.mxu0 %v52
    %742 = vmatprep.subr.mxu0 0.0
    %743 = vmatpush1.msra.mxu0 0.0
    %744 = vmatprep.subr.mxu0 0.0
    %745 = vmatpush1.msra.mxu0 0.0
    %746 = vmatprep.subr.mxu0 0.0
    %747 = vmatpush1.msra.mxu0 0.0
    %748 = vmatprep.subr.mxu0 0.0
    %749 = vmatpush1.msra.mxu0 0.0
    %750 = vmatprep.subr.mxu0 0.0
    %751 = vmatpush1.msra.mxu0 0.0
    %752 = vmatprep.subr.mxu0 0.0
    %753 = vmatpush1.msra.mxu0 0.0
    %754 = vmatprep.subr.mxu0 0.0
    %755 = vmatpush1.msra.mxu0 0.0
    %756 = vmatprep.subr.mxu0 0.0
    %757 = vmatpush1.msra.mxu0 0.0
    %758 = vmatprep.subr.mxu0 0.0
    %759 = vmatpush1.msra.mxu0 0.0
    %760 = vmatprep.subr.mxu0 0.0
    %761 = vmatpush1.msra.mxu0 0.0
    %762 = vmatprep.subr.mxu0 0.0
    %763 = vmatpush1.msra.mxu0 0.0
    %764 = vmatprep.subr.mxu0 0.0
    %765 = vmatpush1.msra.mxu0 0.0
    %766 = vmatprep.subr.mxu0 0.0
    %767 = vmatpush1.msra.mxu0 0.0
    %768 = vmatprep.subr.mxu0 0.0
    %769 = vmatpush1.msra.mxu0 0.0
    %770 = vmatprep.subr.mxu0 0.0
    %771 = vmatpush1.msra.mxu0 0.0
    %772 = vmatprep.subr.mxu0 0.0
    %773 = vmatpush1.msra.mxu0 0.0
    %774 = vmatprep.subr.mxu0 0.0
    %775 = vmatpush1.msra.mxu0 0.0
    %776 = vmatprep.subr.mxu0 0.0
    %777 = vmatpush1.msra.mxu0 0.0
    %778 = vmatprep.subr.mxu0 0.0
    %779 = vmatpush1.msra.mxu0 0.0
    %780 = vmatprep.subr.mxu0 0.0
    %781 = vmatpush1.msra.mxu0 0.0
    %782 = vmatprep.subr.mxu0 0.0
    %783 = vmatpush1.msra.mxu0 0.0
    %784 = vmatprep.subr.mxu0 0.0
    %785 = vmatpush1.msra.mxu0 0.0
    %786 = vmatprep.subr.mxu0 0.0
    %787 = vmatpush1.msra.mxu0 0.0
    %788 = vmatprep.subr.mxu0 0.0
    %789 = vmatpush1.msra.mxu0 0.0
    %790 = vmatprep.subr.mxu0 0.0
    %791 = vmatpush1.msra.mxu0 0.0
    %792 = vmatprep.subr.mxu0 0.0
    %793 = vmatpush1.msra.mxu0 0.0
    %794 = vmatprep.subr.mxu0 0.0
    %795 = vmatpush1.msra.mxu0 0.0
    %796 = vmatprep.subr.mxu0 0.0
    %797 = vmatpush1.msra.mxu0 0.0
    %798 = vmatprep.mubr.f32.mxu0 0.0
    %799 = vmatmul.mubr.f32.gmra.mrb[0].mxu0 %v732
    %v800 = vpop.f32.mrb[0].mxu0
    %v801 = vadd.f32 0.0, %v800
    %v802 = vpop.f32.mrb[0].mxu0
    %803 = vdwg.mxu0
    %v804 = vadd.f32 %v48, %v801
    %v805 = vtanh.pop %v804
    %v806 = vmul.f32 %v805, 0.5
    %v807 = vadd.f32 %v806, 0.5
    %v808 = vmul.f32 %v807, %v722
    %810 = vrot.lane.b32.xlu0 %v805, 64
    %v811 = vpop.permute.xlu0 %810
    %v813 = vmul.f32 %v807, %v811
    %815 = vrot.lane.b32.xlu0 %v813, 32
    %v816 = vpop.permute.xlu0 %815
    %v818 = vadd.f32 %v808, %v816
    %v819 = vtanh.pop %v818
    %821 = vrot.lane.b32.xlu0 %v819, 64
    %v822 = vpop.permute.xlu0 %821
    %v824 = vmul.f32 %v807, %v822
    %v825 = vrot.slane %v248, 7
    %v827 = vrot.slane %v344, 6
    %v829 = vrot.slane %v440, 5
    %v831 = vrot.slane %v536, 4
    %v833 = vrot.slane %v632, 3
    %v835 = vrot.slane %v728, 2
    %v838 = vrot.slane %v824, 1
    %vm840 = vcmask 1040384
    %v841 = vsel %vm840, %v152, %v825
    %vm842 = vcmask 1041408
    %v843 = vsel %vm842, %v841, %v827
    %vm844 = vcmask 1042432
    %v845 = vsel %vm844, %v843, %v829
    %vm846 = vcmask 1043456
    %v847 = vsel %vm846, %v845, %v831
    %vm848 = vcmask 1044480
    %v849 = vsel %vm848, %v847, %v833
    %vm850 = vcmask 1045504
    %v851 = vsel %vm850, %v849, %v835
    %vm852 = vcmask 1046528
    %v853 = vsel %vm852, %v851, %v838
    %v854 = vlaneseq
    %v855 = vshrl.u32 %v854, 7
    %v856 = vsub.s32 0, %v855
    %v857 = vrot.slane %v57, %v856
    %859 = vrot.lane.b32.xlu0 %v853, 32
    %v860 = vpop.permute.xlu0 %859
    %v861 = vsel %vm58, %v860, 0
    %863 = vmatprep.subr.mxu0 0.0
    %864 = vmatpush1.msra.mxu0 %v53
    %865 = vmatprep.subr.mxu0 0.0
    %866 = vmatpush1.msra.mxu0 %v54
    %867 = vmatprep.subr.mxu0 0.0
    %868 = vmatpush1.msra.mxu0 %v55
    %869 = vmatprep.subr.mxu0 0.0
    %870 = vmatpush1.msra.mxu0 %v56
    %871 = vmatprep.subr.mxu0 0.0
    %872 = vmatpush1.msra.mxu0 0.0
    %873 = vmatprep.subr.mxu0 0.0
    %874 = vmatpush1.msra.mxu0 0.0
    %875 = vmatprep.subr.mxu0 0.0
    %876 = vmatpush1.msra.mxu0 0.0
    %877 = vmatprep.subr.mxu0 0.0
    %878 = vmatpush1.msra.mxu0 0.0
    %879 = vmatprep.subr.mxu0 0.0
    %880 = vmatpush1.msra.mxu0 0.0
    %881 = vmatprep.subr.mxu0 0.0
    %882 = vmatpush1.msra.mxu0 0.0
    %883 = vmatprep.subr.mxu0 0.0
    %884 = vmatpush1.msra.mxu0 0.0
    %885 = vmatprep.subr.mxu0 0.0
    %886 = vmatpush1.msra.mxu0 0.0
    %887 = vmatprep.subr.mxu0 0.0
    %888 = vmatpush1.msra.mxu0 0.0
    %889 = vmatprep.subr.mxu0 0.0
    %890 = vmatpush1.msra.mxu0 0.0
    %891 = vmatprep.subr.mxu0 0.0
    %892 = vmatpush1.msra.mxu0 0.0
    %893 = vmatprep.subr.mxu0 0.0
    %894 = vmatpush1.msra.mxu0 0.0
    %895 = vmatprep.subr.mxu0 0.0
    %896 = vmatpush1.msra.mxu0 0.0
    %897 = vmatprep.subr.mxu0 0.0
    %898 = vmatpush1.msra.mxu0 0.0
    %899 = vmatprep.subr.mxu0 0.0
    %900 = vmatpush1.msra.mxu0 0.0
    %901 = vmatprep.subr.mxu0 0.0
    %902 = vmatpush1.msra.mxu0 0.0
    %903 = vmatprep.subr.mxu0 0.0
    %904 = vmatpush1.msra.mxu0 0.0
    %905 = vmatprep.subr.mxu0 0.0
    %906 = vmatpush1.msra.mxu0 0.0
    %907 = vmatprep.subr.mxu0 0.0
    %908 = vmatpush1.msra.mxu0 0.0
    %909 = vmatprep.subr.mxu0 0.0
    %910 = vmatpush1.msra.mxu0 0.0
    %911 = vmatprep.subr.mxu0 0.0
    %912 = vmatpush1.msra.mxu0 0.0
    %913 = vmatprep.subr.mxu0 0.0
    %914 = vmatpush1.msra.mxu0 0.0
    %915 = vmatprep.subr.mxu0 0.0
    %916 = vmatpush1.msra.mxu0 0.0
    %917 = vmatprep.subr.mxu0 0.0
    %918 = vmatpush1.msra.mxu0 0.0
    %919 = vmatprep.subr.mxu0 0.0
    %920 = vmatpush1.msra.mxu0 0.0
    %921 = vmatprep.subr.mxu0 0.0
    %922 = vmatpush1.msra.mxu0 0.0
    %923 = vmatprep.subr.mxu0 0.0
    %924 = vmatpush1.msra.mxu0 0.0
    %925 = vmatprep.subr.mxu0 0.0
    %926 = vmatpush1.msra.mxu0 0.0
    %927 = vmatprep.mubr.f32.mxu0 0.0
    %928 = vmatmul.mubr.f32.gmra.mrb[0].mxu0 %v861
    %v929 = vpop.f32.mrb[0].mxu0
    %v930 = vadd.f32 %v857, %v929
    %v931 = vpop.f32.mrb[0].mxu0
    %932 = vdwg.mxu0
    %933 = vmax.xlane.f32.xlu0 %v930
    %v934 = vpop.xlane.xlu0 %933
    %v935 = vsub.f32 %v930, %v934
    %v936 = vmul.f32 %v935, 1.442695
    %v937 = vpow.pop %v936
    %938 = vadd.xlane.f32.xlu0 %v937
    %v939 = vpop.xlane.xlu0 %938
    %v940 = vlog2.pop %v939
    %v941 = vmul.f32 %v940, 0.6931472
    %v942 = vsub.f32 %v935, %v941
    %943 = vst [vmem:[#allocation5] sm:$0xff] %v942
    // Predicated region
    $region14: #{lstm_tagger_forward.1} parent=1 // pred_check
      _
    $region15: #{lstm_tagger_forward.1} parent=1 // pred_check_branch
      %945 = sbr.rel (0) target = $region17
    $region16: #{lstm_tagger_forward.1} parent=1 // pred_region
      %s947 = ssub.s32 128, 128
      %948 = vsyncadd [#allocation3], %s947
      %s950 = sshll.u32 [#allocation5], 4
      %s951 = int_to_ptr.vmem [resolvable:$true] %s950
      %953 = dma.vmem_to_hbm [thread:$0]  %s951, 128, %s2, [#allocation3]
    $region17: #{lstm_tagger_forward.1} parent=1 // pred_fallthru
      _
    // Predicated region
    $region18: #{lstm_tagger_forward.1} parent=1 // pred_check
      _
    $region19: #{lstm_tagger_forward.1} parent=1 // pred_check_branch
      %955 = sbr.rel (0) target = $region21
    $region20: #{lstm_tagger_forward.1} parent=1 // pred_region
      %956 = dma.done [#allocation3], 128
    $region21: #{lstm_tagger_forward.1} parent=1 // pred_fallthru
      _
    %957 = vsyncpa [#allocation3], 1
    %958 = vsyncpa [#allocation4], 1

</llo_original>
